<compile_context>
chip_gen: v7x
topology: tpu7x:2x2x1
jax: 0.10.0
libtpu: 0.0.40
codegen_flags: <defaults>
</compile_context>

<pallas_src>
import functools
import math

import jax
import jax.numpy as jnp
from jax.experimental import pallas as pl
from jax.experimental.pallas import tpu as pltpu


# --------------------------------------------------------------------------- constants
_H1 = 0x7FEB352D               # lowbias32 multipliers (second expressed as signed int32)
_H2 = 0x846CA68B - (1 << 32)   # == -2073319797
_TARGET_BLOCK_BYTES = 2 * 1024 * 1024   # per-block footprint target; with double
                                        # buffering stays well under scoped VMEM limits


# ----------------------------------------------------------------------------- helpers
def _hash_int32(x):
    """lowbias32-style avalanche hash expressed purely in wrapping int32 ops."""
    x = x ^ ((x >> 16) & 0xFFFF)
    x = x * jnp.int32(_H1)
    x = x ^ ((x >> 15) & 0x1FFFF)
    x = x * jnp.int32(_H2)
    x = x ^ ((x >> 16) & 0xFFFF)
    return x


def _keep_mask(rows, cols, n_cols, seed, threshold):
    """Deterministic per-element keep mask; identical math in-kernel and on host."""
    idx = rows * jnp.int32(n_cols) + cols
    h = _hash_int32(idx ^ seed)
    # Mask to 31 bits so the comparison is an ordinary signed compare.
    return (h & jnp.int32(0x7FFFFFFF)) >= jnp.int32(threshold)


def _choose_tiles(n_rows, n_cols, itemsize):
    tile_rows = n_rows if n_rows <= 8 else 8
    cap = max(128, (_TARGET_BLOCK_BYTES // (tile_rows * itemsize)) // 128 * 128)
    tile_cols = n_cols if n_cols <= cap else cap
    return tile_rows, tile_cols


# ------------------------------------------------------------------------------ kernel
def _pe_dropout_kernel(n_cols, threshold, inv_keep, apply_dropout,
                       seed_ref, x_ref, pe_ref, o_ref):
    """x_ref/o_ref: (tR, tC) block of the [B, S*D] view; pe_ref: (1, tC)."""
    x = x_ref[...]
    y = x + pe_ref[...].astype(x.dtype)                # broadcast over rows, x's dtype
    if apply_dropout:
        tR, tC = x_ref.shape
        col0 = pl.program_id(0) * tC                   # grid = (col_tiles, row_tiles)
        row0 = pl.program_id(1) * tR
        rows = jax.lax.broadcasted_iota(jnp.int32, (tR, tC), 0) + row0
        cols = jax.lax.broadcasted_iota(jnp.int32, (tR, tC), 1) + col0
        keep = _keep_mask(rows, cols, n_cols, seed_ref[0], threshold)
        y = jnp.where(keep, y * jnp.asarray(inv_keep, y.dtype), jnp.zeros_like(y))
    o_ref[...] = y


# ----------------------------------------------------------------------------- wrapper
def positional_encoding_forward(x, pe_full, *, p=0.1, train=False, seed=0):
    """x: [B, S, D]; pe_full: [1, max_len, D] (precomputed buffer)."""
    B, S, D = x.shape
    _, max_len, d_pe = pe_full.shape
    assert d_pe == D and S <= max_len
    assert 0.0 <= p < 1.0  # TODO(synk): p == 1.0 (drop everything) not supported here.

    N = S * D
    itemsize = jnp.dtype(x.dtype).itemsize
    tR, tC = _choose_tiles(B, N, itemsize)

    x2 = x.reshape(B, N)                               # free, contiguous collapse
    if tC % 128 == 0:
        # Free reshape; the first N columns of the flattened buffer are exactly
        # pe[0, :S, :] flattened, so the BlockSpec picks them directly (no HBM copy).
        pe_arr = pe_full.reshape(1, max_len * D)
    else:
        # tC == N and N is not a multiple of 128: the pe block must span pe's full last
        # dim, so materialize the (small) slice once.
        pe_arr = jax.lax.slice(pe_full, (0, 0, 0), (1, S, D)).reshape(1, N)

    apply_dropout = bool(train) and float(p) > 0.0
    threshold = min(int(round(float(p) * (1 << 31))), (1 << 31) - 1)
    inv_keep = 1.0 / (1.0 - float(p))
    seed_arr = jnp.asarray([seed], dtype=jnp.int32)

    kernel = functools.partial(_pe_dropout_kernel, N, threshold, inv_keep, apply_dropout)

    # Row axis innermost so the pe block index (0, c) is unchanged across it and the pe
    # tile is not re-DMA'd per row tile.
    grid = (pl.cdiv(N, tC), pl.cdiv(B, tR))

    out2 = pl.pallas_call(
        kernel,
        out_shape=jax.ShapeDtypeStruct((B, N), x.dtype),
        grid_spec=pltpu.PrefetchScalarGridSpec(
            num_scalar_prefetch=1,
            grid=grid,
            in_specs=[
                pl.BlockSpec((tR, tC), lambda c, r, seed_ref: (r, c)),
                pl.BlockSpec((1, tC), lambda c, r, seed_ref: (0, c)),
            ],
            out_specs=pl.BlockSpec((tR, tC), lambda c, r, seed_ref: (r, c)),
        ),
        compiler_params=pltpu.CompilerParams(
            dimension_semantics=("parallel", "parallel"),
        ),
    )(seed_arr, x2, pe_arr)
    return out2.reshape(B, S, D)


# --------------------------------------------------------------- pe buffer & reference
def make_pe_buffer(d_model: int, max_len: int = 5000, dtype=jnp.float32):
    """Deterministic construction of the `pe` buffer, matching the PyTorch __init__."""
    position = jnp.arange(max_len, dtype=jnp.float32)[:, None]                 # [L, 1]
    div_term = jnp.exp(jnp.arange(0, d_model, 2, dtype=jnp.float32)
                       * (-math.log(10000.0) / d_model))                       # [D/2]
    pe = jnp.zeros((1, max_len, d_model), dtype=jnp.float32)
    pe = pe.at[0, :, 0::2].set(jnp.sin(position * div_term))
    pe = pe.at[0, :, 1::2].set(jnp.cos(position * div_term))
    return pe.astype(dtype)


def positional_encoding_reference(x, pe_full, *, p=0.1, train=False, seed=0):
    """Pure-JAX reference reproducing the kernel (including its dropout mask) exactly."""
    B, S, D = x.shape
    y = x + jax.lax.slice(pe_full, (0, 0, 0), (1, S, D)).astype(x.dtype)
    if train and p > 0.0:
        N = S * D
        rows = jnp.arange(B, dtype=jnp.int32)[:, None]
        cols = jnp.arange(N, dtype=jnp.int32)[None, :]
        threshold = min(int(round(float(p) * (1 << 31))), (1 << 31) - 1)
        keep = _keep_mask(rows, cols, N, jnp.int32(seed), threshold).reshape(B, S, D)
        y = jnp.where(keep, y * jnp.asarray(1.0 / (1.0 - p), y.dtype), jnp.zeros_like(y))
    return y


# --------------------------------------------------------------------------------- main
if __name__ == "__main__":
    B, S, D = 2, 8, 32
    max_len = 64   # small max_len for the synthetic test; semantics identical

    key = jax.random.PRNGKey(0)
    x = jax.random.normal(key, (B, S, D), dtype=jnp.float32)
    pe_full = make_pe_buffer(D, max_len)

    # Eval mode: dropout is identity.
    out_eval = jax.block_until_ready(
        positional_encoding_forward(x, pe_full, p=0.1, train=False))
    ref_eval = positional_encoding_reference(x, pe_full, p=0.1, train=False)
    assert out_eval.shape == (B, S, D)
    assert jnp.allclose(out_eval, ref_eval, atol=1e-6, rtol=1e-6), "eval-mode mismatch"

    # Train mode: deterministic in-kernel dropout, reproduced exactly by the reference.
    out_train = jax.block_until_ready(
        positional_encoding_forward(x, pe_full, p=0.1, train=True, seed=1234))
    ref_train = positional_encoding_reference(x, pe_full, p=0.1, train=True, seed=1234)
    assert out_train.shape == (B, S, D)
    assert jnp.allclose(out_train, ref_train, atol=1e-5, rtol=1e-5), "train-mode mismatch"
    frac_kept = float(jnp.mean((out_train != 0.0).astype(jnp.float32)))
    assert 0.75 <= frac_kept <= 0.99, f"dropout keep fraction looks wrong: {frac_kept}"

    print("KERNEL_OK")
</pallas_src>

<mosaic_0001>
module attributes {stable_mosaic.version = 11 : i64} {
  func.func @_pe_dropout_kernel(%arg0: i32, %arg1: i32, %arg2: memref<1xi32, #tpu.memory_space<smem>>, %arg3: memref<2x256xf32, #tpu.memory_space<vmem>>, %arg4: memref<1x256xf32, #tpu.memory_space<vmem>>, %arg5: memref<2x256xf32, #tpu.memory_space<vmem>>) attributes {dimension_semantics = [#tpu.dimension_semantics<parallel>, #tpu.dimension_semantics<parallel>], iteration_bounds = array<i64: 1, 1>, scalar_prefetch = 1 : i64, scratch_operands = 0 : i64, tpu.core_type = #tpu.core_type<tc>, window_params = [{transform_indices = @transform_0, window_bounds = array<i64: 2, 256>}, {transform_indices = @transform_1, window_bounds = array<i64: 1, 256>}, {transform_indices = @transform_2, window_bounds = array<i64: 2, 256>}]} {
    %c0 = arith.constant 0 : index
    %c0_0 = arith.constant 0 : index
    %0 = vector.load %arg3[%c0, %c0_0] : memref<2x256xf32, #tpu.memory_space<vmem>>, vector<2x256xf32>
    %c0_1 = arith.constant 0 : index
    %c0_2 = arith.constant 0 : index
    %1 = vector.load %arg4[%c0_1, %c0_2] : memref<1x256xf32, #tpu.memory_space<vmem>>, vector<1x256xf32>
    %2 = vector.broadcast %1 : vector<1x256xf32> to vector<2x256xf32>
    %3 = arith.addf %0, %2 : vector<2x256xf32>
    %c0_3 = arith.constant 0 : index
    %c0_4 = arith.constant 0 : index
    %4 = vector.load %arg5[%c0_3, %c0_4] : memref<2x256xf32, #tpu.memory_space<vmem>>, vector<2x256xf32>
    tpu.vector_store %arg5[%c0_3, %c0_4], %3 {strides = array<i32>} : memref<2x256xf32, #tpu.memory_space<vmem>>, vector<2x256xf32>,
    return
  }
  func.func @transform_0(%arg0: i32, %arg1: i32, %arg2: memref<1xi32, #tpu.memory_space<smem>>) -> (i32, i32) {
    %c0_i32 = arith.constant 0 : i32
    return %arg1, %arg0 : i32, i32
  }
  func.func @transform_1(%arg0: i32, %arg1: i32, %arg2: memref<1xi32, #tpu.memory_space<smem>>) -> (i32, i32) {
    %c0_i32 = arith.constant 0 : i32
    %c0_i32_0 = arith.constant 0 : i32
    return %c0_i32, %arg0 : i32, i32
  }
  func.func @transform_2(%arg0: i32, %arg1: i32, %arg2: memref<1xi32, #tpu.memory_space<smem>>) -> (i32, i32) {
    %c0_i32 = arith.constant 0 : i32
    return %arg1, %arg0 : i32, i32
  }
}

</mosaic_0001>

<llo_original>
// kernel: tpu_custom_call.1
$region0: #{tpu_custom_call.1}
  #allocation0 [shape = 'u32[]', space=smem, size = 0x4, offset = 0x4, fixed_abs, tag = 'smem constant byte address 0x4 - core index']
  #allocation1 [shape = 'u32[144,128]{1,0:T(1,128)}', space=vmem, size = 0x12000, scoped, tag = 'internal scratch']
  #allocation2 [shape = 's32[1]{0}', space=sflag, size = 0x4, scoped, tag = 'scoped memory for tpu_custom_call.1']
  #allocation3 [shape = 's32[1]{0:T(128)S(6)}', space=smem, size = 0x200, scoped, tag = 'prefetched SMEM operand 0']
  %s0 = inlined_call_operand.<no memory space> [shape: s32[1], index: 0, kind: input, shape index: {}]
  %s1 = inlined_call_operand.hbm [shape: f32[2,256], index: 1, kind: input, shape index: {}]
  %s2 = inlined_call_operand.hbm [shape: f32[1,2048], index: 2, kind: input, shape index: {}]
  %s3 = inlined_call_operand.hbm [shape: f32[2,256], index: 3, kind: output, shape index: {}]
  %s4 = sld [smem:[#allocation0]]
  $region26: #{tpu_custom_call.1} parent=0
    _
  %s6 = ssub.s32 1, %s4
  %s7 = scalar_select 0, %s6, %s4
  %8 = sst [smem:[#allocation3]] %s0
  $region1: #{tpu_custom_call.1} parent=0
    #allocation4 [shape = 'u8[2048]{0}', space=vmem, size = 0x800, scoped, tag = 'input window, operand 1, single buffered']
    #allocation5 [shape = 's32[1]{0}', space=sflag, size = 0x4, scoped, tag = 'scoped memory for tpu_custom_call.1']
    #allocation6 [shape = 's32[1]{0}', space=sflag, size = 0x4, scoped, tag = 'scoped memory for tpu_custom_call.1']
    #allocation7 [shape = 'u8[1024]{0}', space=vmem, size = 0x400, scoped, tag = 'input window, operand 2, single buffered']
    #allocation8 [shape = 's32[1]{0}', space=sflag, size = 0x4, scoped, tag = 'scoped memory for tpu_custom_call.1']
    #allocation9 [shape = 'u8[2048]{0}', space=vmem, size = 0x800, scoped, tag = 'output window, operand 0, single buffered']
    %9 = vsyncpa [#allocation5], 0
    %10 = vsyncpa [#allocation8], 0
    %11 = vsyncpa [#allocation6], 0
    // Predicated region
    $region2: #{tpu_custom_call.1} parent=1 // pred_check
      _
    $region3: #{tpu_custom_call.1} parent=1 // pred_check_branch
      %13 = sbr.rel (0) target = $region5
    $region4: #{tpu_custom_call.1} parent=1 // pred_region
      %s15 = ssub.s32 64, 64
      %16 = vsyncadd [#allocation5], %s15
      %s18 = sshll.u32 [#allocation4], 4
      %s19 = int_to_ptr.vmem [resolvable:$true] %s18
      %21 = dma.hbm_to_vmem [thread:$0]  %s1, 64, %s19, [#allocation5]
    $region5: #{tpu_custom_call.1} parent=1 // pred_fallthru
      _
    // Predicated region
    $region6: #{tpu_custom_call.1} parent=1 // pred_check
      _
    $region7: #{tpu_custom_call.1} parent=1 // pred_check_branch
      %23 = sbr.rel (0) target = $region9
    $region8: #{tpu_custom_call.1} parent=1 // pred_region
      %s25 = ssub.s32 32, 32
      %26 = vsyncadd [#allocation8], %s25
      %s28 = sshll.u32 [#allocation7], 4
      %s29 = int_to_ptr.vmem [resolvable:$true] %s28
      %31 = dma.hbm_to_vmem [thread:$0]  %s2, 32, %s29, [#allocation8]
    $region9: #{tpu_custom_call.1} parent=1 // pred_fallthru
      _
    // Predicated region
    $region10: #{tpu_custom_call.1} parent=1 // pred_check
      _
    $region11: #{tpu_custom_call.1} parent=1 // pred_check_branch
      %33 = sbr.rel (0) target = $region13
    $region12: #{tpu_custom_call.1} parent=1 // pred_region
      %34 = dma.done [#allocation5], 64
    $region13: #{tpu_custom_call.1} parent=1 // pred_fallthru
      _
    // Predicated region
    $region14: #{tpu_custom_call.1} parent=1 // pred_check
      _
    $region15: #{tpu_custom_call.1} parent=1 // pred_check_branch
      %36 = sbr.rel (0) target = $region17
    $region16: #{tpu_custom_call.1} parent=1 // pred_region
      %37 = dma.done [#allocation8], 32
    $region17: #{tpu_custom_call.1} parent=1 // pred_fallthru
      _
    %v38 = vld [vmem:[#allocation4] sm:$0xf]
    %v39 = vld [vmem:[#allocation7] sm:$0x3]
    %v41 = vlaneseq
    %v42 = vshrl.u32 %v41, 7
    %v43 = vsub.s32 0, %v42
    %v44 = vrot.slane %v39, %v43
    %v45 = vlaneseq
    %v46 = vshrl.u32 %v45, 7
    %v47 = vsub.s32 1, %v46
    %v48 = vrot.slane %v39, %v47
    %v49 = vcombine.low %v44, %v48
    %v51 = vunpack.c.l.s4 1983009808
    %v52 = vunpack.c.0.s8 %v51
    %v53 = vlaneseq
    %v54 = vshrl.u32 %v53, 7
    %v55 = vsub.s32 %v52, %v54
    %v56 = vrot.slane %v49, %v55
    %v58 = vadd.f32 %v38, %v56
    %59 = vst [vmem:[#allocation9] sm:$0xf] %v58
    // Predicated region
    $region18: #{tpu_custom_call.1} parent=1 // pred_check
      _
    $region19: #{tpu_custom_call.1} parent=1 // pred_check_branch
      %61 = sbr.rel (0) target = $region21
    $region20: #{tpu_custom_call.1} parent=1 // pred_region
      %s63 = ssub.s32 64, 64
      %64 = vsyncadd [#allocation6], %s63
      %s66 = sshll.u32 [#allocation9], 4
      %s67 = int_to_ptr.vmem [resolvable:$true] %s66
      %69 = dma.vmem_to_hbm [thread:$0]  %s67, 64, %s3, [#allocation6]
    $region21: #{tpu_custom_call.1} parent=1 // pred_fallthru
      _
    // Predicated region
    $region22: #{tpu_custom_call.1} parent=1 // pred_check
      _
    $region23: #{tpu_custom_call.1} parent=1 // pred_check_branch
      %71 = sbr.rel (0) target = $region25
    $region24: #{tpu_custom_call.1} parent=1 // pred_region
      %72 = dma.done [#allocation6], 64
    $region25: #{tpu_custom_call.1} parent=1 // pred_fallthru
      _
    %73 = vsyncpa [#allocation5], 1
    %74 = vsyncpa [#allocation8], 1
    %75 = vsyncpa [#allocation6], 1

</llo_original>
